<compile_context>
chip_gen: v7x
topology: tpu7x:2x2x1
jax: 0.10.0
libtpu: 0.0.40
codegen_flags: <defaults>
</compile_context>

<pallas_src>
import functools

import jax
import jax.numpy as jnp
from jax.experimental import pallas as pl
from jax.experimental.pallas import tpu as pltpu

_LANE = 128


def _round_up(x, m):
    return ((x + m - 1) // m) * m


def _nll_loss_kernel(pred_ref, tgt_ref, out_ref, acc_ref, *,
                     total_n, tiles_per_p, mask_rows):
    """One grid step: accumulate onehot(target)^T @ pred into a (C, C) scratch.

    The gather sum_r pred[r, target[r]] equals trace(onehot^T @ pred), which
    keeps the target in its natural lane-major layout and uses the idle MXU.
    """
    p = pl.program_id(0)
    i = pl.program_id(1)

    @pl.when(i == 0)
    def _init():
        acc_ref[...] = jnp.zeros_like(acc_ref)

    pred = pred_ref[...].astype(jnp.float32)            # (tn, C), f32 accumulation
    tn, c = pred.shape
    tgt = tgt_ref[...]                                   # (1, tn) int32, lane-major

    # Clamp -inf log-probs so 0 * (-inf) cannot produce NaN in the MXU sum.
    pred = jnp.maximum(pred, jnp.finfo(jnp.float32).min)

    if mask_rows:
        # Zero rows of a partial last tile (also kills NaN/Inf garbage there).
        row0 = (p * tiles_per_p + i) * tn
        rows = jax.lax.broadcasted_iota(jnp.int32, (tn, 1), 0) + row0
        pred = jnp.where(rows < total_n, pred, 0.0)

    # Transposed one-hot, built entirely in natural layouts:
    #   class ids on sublanes (C, 1)  vs  target on lanes (1, tn).
    class_col = jax.lax.broadcasted_iota(jnp.int32, (c, 1), 0)
    onehot_t = (class_col == tgt).astype(jnp.float32)    # (C, tn)

    acc_ref[...] += jnp.dot(onehot_t, pred,
                            preferred_element_type=jnp.float32,
                            precision=jax.lax.Precision.HIGHEST)

    @pl.when(i == pl.num_programs(1) - 1)
    def _finalize():
        row_id = jax.lax.broadcasted_iota(jnp.int32, (c, c), 0)
        col_id = jax.lax.broadcasted_iota(jnp.int32, (c, c), 1)
        diag_sum = jnp.sum(jnp.where(row_id == col_id, acc_ref[...], 0.0))
        out_ref[...] = jnp.zeros((1, 1), jnp.float32) + diag_sum


def get_loss(pred, target, trans_feat=None, max_tile_n=8192):
    """Pallas TPU equivalent of F.nll_loss(pred, target), mean reduction.

    pred:   (N, C) log-probabilities (f32 or bf16; accumulation is f32)
    target: (N,)   integer class indices in [0, C)
    trans_feat: unused (kept for signature parity with the PyTorch module)
    """
    del trans_feat  # reference forward ignores it
    n, c = pred.shape
    itemsize = jnp.dtype(pred.dtype).itemsize
    c_pad = _round_up(c, _LANE)

    # Batch tile: as many rows as a ~6 MiB (per pipeline buffer) pred slab
    # allows, multiple of 128 so the lane-major target block stays legal,
    # capped at max_tile_n.  Double-buffered by the BlockSpec pipeline.
    budget = 6 * 1024 * 1024
    tile_n = max(_LANE,
                 min(max_tile_n, (budget // (c_pad * itemsize)) // _LANE * _LANE))
    if n <= tile_n:
        tile_n = n  # single full block (full-dim blocks are always legal)
    total_tiles = pl.cdiv(n, tile_n)

    # 2-way split of the batch tiles for the v7x megacore (no-op on v5e/v6e).
    # Only split when it divides evenly so every block index stays in range.
    num_parallel = 2 if (total_tiles % 2 == 0 and total_tiles >= 2) else 1
    tiles_per_p = total_tiles // num_parallel

    tgt_row = target.astype(jnp.int32).reshape(1, n)     # lane-dense target

    kernel = functools.partial(
        _nll_loss_kernel,
        total_n=n,
        tiles_per_p=tiles_per_p,
        mask_rows=(n % tile_n != 0),
    )

    partials = pl.pallas_call(
        kernel,
        out_shape=jax.ShapeDtypeStruct((num_parallel, 1), jnp.float32),
        grid=(num_parallel, tiles_per_p),
        in_specs=[
            pl.BlockSpec((tile_n, c), lambda p, i: (p * tiles_per_p + i, 0)),
            pl.BlockSpec((1, tile_n), lambda p, i: (0, p * tiles_per_p + i)),
        ],
        # Same output block across the reduction axis -> resident accumulator;
        # one row per parallel block.
        out_specs=pl.BlockSpec((1, 1), lambda p, i: (p, 0)),
        scratch_shapes=[pltpu.VMEM((c, c), jnp.float32)],
        compiler_params=pltpu.CompilerParams(
            dimension_semantics=("parallel", "arbitrary"),
            vmem_limit_bytes=48 * 1024 * 1024,
        ),
    )(pred, tgt_row)

    return -jnp.sum(partials) / jnp.float32(n)


if __name__ == "__main__":
    key = jax.random.PRNGKey(0)
    k1, k2, k3 = jax.random.split(key, 3)

    N, C = 8, 32  # small batch of 8 samples, 32 classes
    # Valid log-probabilities, as the PointNet classifier head would emit.
    logits = jax.random.normal(k1, (N, C), dtype=jnp.float32)
    pred = jax.nn.log_softmax(logits, axis=-1)
    target = jax.random.randint(k2, (N,), 0, C, dtype=jnp.int32)
    trans_feat = jax.random.normal(k3, (N, 64, 64), dtype=jnp.float32)  # unused

    loss = get_loss(pred, target, trans_feat)
    loss = jax.block_until_ready(loss)

    # Pure-JAX reference (same semantics as F.nll_loss mean reduction).
    ref = -jnp.mean(pred[jnp.arange(N), target])
    assert jnp.allclose(loss, ref, atol=1e-5, rtol=1e-5), (loss, ref)

    print("KERNEL_OK")
</pallas_src>

<mosaic_0001>
module attributes {stable_mosaic.version = 11 : i64} {
  func.func @_nll_loss_kernel(%arg0: i32, %arg1: i32, %arg2: memref<8x32xf32, #tpu.memory_space<vmem>>, %arg3: memref<1x8xi32, #tpu.memory_space<vmem>>, %arg4: memref<1x1xf32, #tpu.memory_space<vmem>>, %arg5: memref<32x32xf32, #tpu.memory_space<vmem>>) attributes {dimension_semantics = [#tpu.dimension_semantics<parallel>, #tpu.dimension_semantics<arbitrary>], iteration_bounds = array<i64: 1, 1>, scalar_prefetch = 0 : i64, scratch_operands = 1 : i64, tpu.core_type = #tpu.core_type<tc>, window_params = [{transform_indices = @transform_0, window_bounds = array<i64: 8, 32>}, {transform_indices = @transform_1, window_bounds = array<i64: 1, 8>}, {transform_indices = @transform_2, window_bounds = array<i64: 1, 1>}]} {
    %c0_i32 = arith.constant 0 : i32
    %0 = arith.cmpi eq, %arg1, %c0_i32 : i32
    %1 = arith.extui %0 : i1 to i32
    %c0_i32_0 = arith.constant 0 : i32
    %2 = arith.cmpi ne, %1, %c0_i32_0 : i32
    scf.if %2 {
      %cst_11 = arith.constant 0.000000e+00 : f32
      %20 = vector.broadcast %cst_11 : f32 to vector<32x32xf32>
      %c0_12 = arith.constant 0 : index
      %c0_13 = arith.constant 0 : index
      %21 = vector.load %arg5[%c0_12, %c0_13] : memref<32x32xf32, #tpu.memory_space<vmem>>, vector<32x32xf32>
      tpu.vector_store %arg5[%c0_12, %c0_13], %20 {strides = array<i32>} : memref<32x32xf32, #tpu.memory_space<vmem>>, vector<32x32xf32>,
    } else {
    }
    %c0 = arith.constant 0 : index
    %c0_1 = arith.constant 0 : index
    %3 = vector.load %arg2[%c0, %c0_1] : memref<8x32xf32, #tpu.memory_space<vmem>>, vector<8x32xf32>
    %c0_2 = arith.constant 0 : index
    %c0_3 = arith.constant 0 : index
    %4 = vector.load %arg3[%c0_2, %c0_3] : memref<1x8xi32, #tpu.memory_space<vmem>>, vector<1x8xi32>
    %cst = arith.constant -3.40282347E+38 : f32
    %5 = vector.broadcast %cst : f32 to vector<8x32xf32>
    %6 = arith.maximumf %3, %5 : vector<8x32xf32>
    %7 = tpu.iota {dimensions = array<i32: 0>} : vector<32x1xi32>
    %8 = vector.broadcast %7 : vector<32x1xi32> to vector<32x8xi32>
    %9 = vector.broadcast %4 : vector<1x8xi32> to vector<32x8xi32>
    %10 = arith.cmpi eq, %8, %9 : vector<32x8xi32>
    %11 = arith.extui %10 : vector<32x8xi1> to vector<32x8xi32>
    %12 = arith.sitofp %11 : vector<32x8xi32> to vector<32x8xf32>
    %c0_4 = arith.constant 0 : index
    %c0_5 = arith.constant 0 : index
    %13 = vector.load %arg5[%c0_4, %c0_5] : memref<32x32xf32, #tpu.memory_space<vmem>>, vector<32x32xf32>
    %cst_6 = arith.constant dense<0.000000e+00> : vector<32x32xf32>
    %14 = tpu.matmul %12, %6, %cst_6 {dimension_numbers = #tpu.dot_dimension_numbers<[1], [0], [0], [1], [0, 0, 1, 1], [], []>, precision = #tpu.contract_precision<fp32>} : vector<32x8xf32>, vector<8x32xf32>, vector<32x32xf32> -> vector<32x32xf32>
    %15 = arith.addf %13, %14 : vector<32x32xf32>
    %c0_7 = arith.constant 0 : index
    %c0_8 = arith.constant 0 : index
    %16 = vector.load %arg5[%c0_7, %c0_8] : memref<32x32xf32, #tpu.memory_space<vmem>>, vector<32x32xf32>
    tpu.vector_store %arg5[%c0_7, %c0_8], %15 {strides = array<i32>} : memref<32x32xf32, #tpu.memory_space<vmem>>, vector<32x32xf32>,
    %c0_i32_9 = arith.constant 0 : i32
    %17 = arith.cmpi eq, %arg1, %c0_i32_9 : i32
    %18 = arith.extui %17 : i1 to i32
    %c0_i32_10 = arith.constant 0 : i32
    %19 = arith.cmpi ne, %18, %c0_i32_10 : i32
    scf.if %19 {
      %20 = tpu.iota {dimensions = array<i32: 0>} : vector<32x32xi32>
      %21 = tpu.iota {dimensions = array<i32: 1>} : vector<32x32xi32>
      %22 = arith.cmpi eq, %20, %21 : vector<32x32xi32>
      %c0_11 = arith.constant 0 : index
      %c0_12 = arith.constant 0 : index
      %23 = vector.load %arg5[%c0_11, %c0_12] : memref<32x32xf32, #tpu.memory_space<vmem>>, vector<32x32xf32>
      %cst_13 = arith.constant 0.000000e+00 : f32
      %24 = vector.broadcast %cst_13 : f32 to vector<32x32xf32>
      %25 = arith.select %22, %23, %24 : vector<32x32xi1>, vector<32x32xf32>
      %26 = vector.shape_cast %25 : vector<32x32xf32> to vector<1x32x32xf32>
      %cst_14 = arith.constant dense<0.000000e+00> : vector<1xf32>
      %27 = vector.multi_reduction <add>, %26, %cst_14 [1, 2] : vector<1x32x32xf32> to vector<1xf32>
      %28 = vector.shape_cast %27 : vector<1xf32> to vector<1x1x1xf32>
      %29 = vector.extract %28[0, 0, 0] : f32 from vector<1x1x1xf32>
      %cst_15 = arith.constant 0.000000e+00 : f32
      %30 = vector.broadcast %cst_15 : f32 to vector<1x1xf32>
      %31 = vector.broadcast %29 : f32 to vector<1x1xf32>
      %32 = arith.addf %30, %31 : vector<1x1xf32>
      %c0_16 = arith.constant 0 : index
      %c0_17 = arith.constant 0 : index
      %33 = vector.load %arg4[%c0_16, %c0_17] : memref<1x1xf32, #tpu.memory_space<vmem>>, vector<1x1xf32>
      tpu.vector_store %arg4[%c0_16, %c0_17], %32 {strides = array<i32>} : memref<1x1xf32, #tpu.memory_space<vmem>>, vector<1x1xf32>,
    } else {
    }
    return
  }
  func.func @transform_0(%arg0: i32, %arg1: i32) -> (i32, i32) {
    %c1_i32 = arith.constant 1 : i32
    %0 = arith.muli %arg0, %c1_i32 : i32
    %1 = arith.addi %0, %arg1 : i32
    %c0_i32 = arith.constant 0 : i32
    %c0_i32_0 = arith.constant 0 : i32
    return %1, %c0_i32 : i32, i32
  }
  func.func @transform_1(%arg0: i32, %arg1: i32) -> (i32, i32) {
    %c1_i32 = arith.constant 1 : i32
    %0 = arith.muli %arg0, %c1_i32 : i32
    %1 = arith.addi %0, %arg1 : i32
    %c0_i32 = arith.constant 0 : i32
    %c0_i32_0 = arith.constant 0 : i32
    return %c0_i32, %1 : i32, i32
  }
  func.func @transform_2(%arg0: i32, %arg1: i32) -> (i32, i32) {
    %c0_i32 = arith.constant 0 : i32
    %c0_i32_0 = arith.constant 0 : i32
    return %arg0, %c0_i32 : i32, i32
  }
}

</mosaic_0001>

<llo_original>
// kernel: tpu_custom_call.1
$region0: #{tpu_custom_call.1}
  #allocation0 [shape = 'u32[]', space=smem, size = 0x4, offset = 0x4, fixed_abs, tag = 'smem constant byte address 0x4 - core index']
  #allocation1 [shape = 'u32[144,128]{1,0:T(1,128)}', space=vmem, size = 0x12000, scoped, tag = 'internal scratch']
  #allocation2 [shape = 'f32[32,32]{1,0:T(8,128)}', space=vmem, size = 0x4000, scoped, tag = 'scratch operand']
  %s0 = inlined_call_operand.hbm [shape: f32[8,32], index: 0, kind: input, shape index: {}]
  %s1 = inlined_call_operand.vmem [shape: s32[1,8], index: 1, kind: input, shape index: {}]
  %s2 = inlined_call_operand.hbm [shape: f32[1,1], index: 2, kind: output, shape index: {}]
  %s3 = sld [smem:[#allocation0]]
  $region30: #{tpu_custom_call.1} parent=0
    _
  %s5 = ssub.s32 1, %s3
  %s6 = scalar_select 0, %s5, %s3
  $region1: #{tpu_custom_call.1} parent=0
    #allocation3 [shape = 'u8[4096]{0}', space=vmem, size = 0x1000, scoped, tag = 'input window, operand 0, single buffered']
    #allocation4 [shape = 's32[1]{0}', space=sflag, size = 0x4, scoped, tag = 'scoped memory for tpu_custom_call.1']
    #allocation5 [shape = 's32[1]{0}', space=sflag, size = 0x4, scoped, tag = 'scoped memory for tpu_custom_call.1']
    #allocation6 [shape = 'u8[512]{0}', space=vmem, size = 0x400, scoped, tag = 'output window, operand 0, single buffered']
    %7 = vsyncpa [#allocation4], 0
    %8 = vsyncpa [#allocation5], 0
    // Predicated region
    $region2: #{tpu_custom_call.1} parent=1 // pred_check
      _
    $region3: #{tpu_custom_call.1} parent=1 // pred_check_branch
      %10 = sbr.rel (0) target = $region5
    $region4: #{tpu_custom_call.1} parent=1 // pred_region
      %s11 = sadd.s32 0, 0
      %s13 = ssub.s32 128, 128
      %14 = vsyncadd [#allocation4], %s13
      %s15 = smul.addr %s11, 128
      %s16 = scalar_lea.hbm %s0, %s15
      %s18 = sshll.u32 [#allocation3], 4
      %s19 = int_to_ptr.vmem [resolvable:$true] %s18
      %21 = dma.hbm_to_vmem [thread:$0]  %s16, 128, %s19, [#allocation4]
    $region5: #{tpu_custom_call.1} parent=1 // pred_fallthru
      _
    // Predicated region
    $region6: #{tpu_custom_call.1} parent=1 // pred_check
      _
    $region7: #{tpu_custom_call.1} parent=1 // pred_check_branch
      %23 = sbr.rel (0) target = $region9
    $region8: #{tpu_custom_call.1} parent=1 // pred_region
      %s24 = sadd.s32 0, 0
      %p25 = scmp.lt.s32.totalorder %s24, 0
      %s26 = scalar_select %p25, %s24, 0
      %s27 = scalar_lea.vmem %s1, %s26
      %s28 = sadd.s32 0, 0
    $region9: #{tpu_custom_call.1} parent=1 // pred_fallthru
      _
    // Predicated region
    $region10: #{tpu_custom_call.1} parent=1 // pred_check
      _
    $region11: #{tpu_custom_call.1} parent=1 // pred_check_branch
      %30 = sbr.rel (0) target = $region13
    $region12: #{tpu_custom_call.1} parent=1 // pred_region
      %31 = dma.done [#allocation4], 128
    $region13: #{tpu_custom_call.1} parent=1 // pred_fallthru
      _
    %s32 = sadd.s32 0, 0
    %p33 = scmp.lt.s32.totalorder %s32, 0
    %s34 = scalar_select %p33, %s32, 0
    %s35 = scalar_lea.vmem %s1, %s34
    %s36 = sadd.s32 0, 0
    %s37 = sadd.s32 0, 0
    %p38 = scmp.lt.s32.totalorder %s37, 0
    %s39 = scalar_select %p38, %s37, 0
    %s40 = scalar_lea.vmem %s1, %s39
    %s41 = sadd.s32 0, 0
    %p42 = scmp.eq.s32.totalorder 0, 0
    // Predicated region
    $region14: #{tpu_custom_call.1} parent=1 // pred_check
      %p43 = pneg %p42
    $region15: #{tpu_custom_call.1} parent=1 // pred_check_branch
      %45 = sbr.rel (%p43) target = $region17
    $region16: #{tpu_custom_call.1} parent=1 // pred_region
      %vm46 = vcmask 261120
      %47 = vst.msk [vmem:[#allocation2] sm:$0xff] %vm46, 0.0
      %48 = vst.msk [vmem:[#allocation2 + $0x8] sm:$0xff] %vm46, 0.0
      %49 = vst.msk [vmem:[#allocation2 + $0x10] sm:$0xff] %vm46, 0.0
      %50 = vst.msk [vmem:[#allocation2 + $0x18] sm:$0xff] %vm46, 0.0
    $region17: #{tpu_custom_call.1} parent=1 // pred_fallthru
      _
    %v51 = vld [vmem:[#allocation3] sm:$0xff]
    %v52 = vld [vmem:[%s40] sm:$0x1]
    %v53 = vmax.f32 %v51, -3.4028235e+38
    %v54 = vlaneseq
    %v55 = vshrl.u32 %v54, 7
    %v56 = vadd.s32 %v55, 8
    %v57 = vadd.s32 %v55, 16
    %v58 = vadd.s32 %v55, 24
    %v59 = vlaneseq
    %v60 = vshrl.u32 %v59, 7
    %v61 = vsub.s32 0, %v60
    %v62 = vrot.slane %v52, %v61
    %vm63 = vcmp.eq.s32.totalorder %v55, %v62
    %vm64 = vcmp.eq.s32.totalorder %v56, %v62
    %vm65 = vcmp.eq.s32.totalorder %v57, %v62
    %vm66 = vcmp.eq.s32.totalorder %v58, %v62
    %v67 = vsel %vm63, 1, 0
    %v68 = vsel %vm64, 1, 0
    %v69 = vsel %vm65, 1, 0
    %v70 = vsel %vm66, 1, 0
    %v71 = vcvt.s32.f32 %v67
    %v72 = vcvt.s32.f32 %v68
    %v73 = vcvt.s32.f32 %v69
    %v74 = vcvt.s32.f32 %v70
    %v75 = vld [vmem:[#allocation2] sm:$0xff]
    %v76 = vld [vmem:[#allocation2 + $0x8] sm:$0xff]
    %v77 = vld [vmem:[#allocation2 + $0x10] sm:$0xff]
    %v78 = vld [vmem:[#allocation2 + $0x18] sm:$0xff]
    %vm79 = vcmask 64512
    %v81 = vsel %vm79, %v71, 0
    %v84 = vsel %vm79, %v72, 0
    %v87 = vsel %vm79, %v73, 0
    %v90 = vsel %vm79, %v74, 0
    %92 = vmatprep.subr.mxu0 0.0
    %v93 = vand.u32 %v53, 4294901760
    %94 = vmatpush1.msra.mxu0 %v93
    %95 = vmatprep.subr.mxu0 0.0
    %96 = vmatpush1.msra.mxu0 0.0
    %97 = vmatprep.subr.mxu0 0.0
    %98 = vmatpush1.msra.mxu0 0.0
    %99 = vmatprep.subr.mxu0 0.0
    %100 = vmatpush1.msra.mxu0 0.0
    %101 = vmatprep.subr.mxu0 0.0
    %102 = vmatpush1.msra.mxu0 0.0
    %103 = vmatprep.subr.mxu0 0.0
    %104 = vmatpush1.msra.mxu0 0.0
    %105 = vmatprep.subr.mxu0 0.0
    %106 = vmatpush1.msra.mxu0 0.0
    %107 = vmatprep.subr.mxu0 0.0
    %108 = vmatpush1.msra.mxu0 0.0
    %109 = vmatprep.subr.mxu0 0.0
    %110 = vmatpush1.msra.mxu0 0.0
    %111 = vmatprep.subr.mxu0 0.0
    %112 = vmatpush1.msra.mxu0 0.0
    %113 = vmatprep.subr.mxu0 0.0
    %114 = vmatpush1.msra.mxu0 0.0
    %115 = vmatprep.subr.mxu0 0.0
    %116 = vmatpush1.msra.mxu0 0.0
    %117 = vmatprep.subr.mxu0 0.0
    %118 = vmatpush1.msra.mxu0 0.0
    %119 = vmatprep.subr.mxu0 0.0
    %120 = vmatpush1.msra.mxu0 0.0
    %121 = vmatprep.subr.mxu0 0.0
    %122 = vmatpush1.msra.mxu0 0.0
    %123 = vmatprep.subr.mxu0 0.0
    %124 = vmatpush1.msra.mxu0 0.0
    %125 = vmatprep.subr.mxu0 0.0
    %126 = vmatpush1.msra.mxu0 0.0
    %127 = vmatprep.subr.mxu0 0.0
    %128 = vmatpush1.msra.mxu0 0.0
    %129 = vmatprep.subr.mxu0 0.0
    %130 = vmatpush1.msra.mxu0 0.0
    %131 = vmatprep.subr.mxu0 0.0
    %132 = vmatpush1.msra.mxu0 0.0
    %133 = vmatprep.subr.mxu0 0.0
    %134 = vmatpush1.msra.mxu0 0.0
    %135 = vmatprep.subr.mxu0 0.0
    %136 = vmatpush1.msra.mxu0 0.0
    %137 = vmatprep.subr.mxu0 0.0
    %138 = vmatpush1.msra.mxu0 0.0
    %139 = vmatprep.subr.mxu0 0.0
    %140 = vmatpush1.msra.mxu0 0.0
    %141 = vmatprep.subr.mxu0 0.0
    %142 = vmatpush1.msra.mxu0 0.0
    %143 = vmatprep.subr.mxu0 0.0
    %144 = vmatpush1.msra.mxu0 0.0
    %145 = vmatprep.subr.mxu0 0.0
    %146 = vmatpush1.msra.mxu0 0.0
    %147 = vmatprep.subr.mxu0 0.0
    %148 = vmatpush1.msra.mxu0 0.0
    %149 = vmatprep.subr.mxu0 0.0
    %150 = vmatpush1.msra.mxu0 0.0
    %151 = vmatprep.subr.mxu0 0.0
    %152 = vmatpush1.msra.mxu0 0.0
    %153 = vmatprep.subr.mxu0 0.0
    %154 = vmatpush1.msra.mxu0 0.0
    %155 = vmatprep.subr.mxu0 0.0
    %156 = vmatpush1.msra.mxu0 0.0
    %157 = vmatprep.mubr.f32.mxu0 0.0
    %v158 = vand.u32 %v81, 4294901760
    %v159 = vsub.f32 %v81, %v158
    %v160 = vand.u32 %v159, 4294901760
    %v161 = vsub.f32 %v159, %v160
    %v162 = vand.u32 %v161, 4294901760
    %163 = vmatmul.mubr.f32.gmra.mrb[0].mxu0 %v162
    %v164 = vpop.f32.mrb[0].mxu0
    %v165 = vadd.f32 0.0, %v164
    %v166 = vpop.f32.mrb[0].mxu0
    %167 = vmatprep.mubr.f32.mxu0 0.0
    %v168 = vand.u32 %v84, 4294901760
    %v169 = vsub.f32 %v84, %v168
    %v170 = vand.u32 %v169, 4294901760
    %v171 = vsub.f32 %v169, %v170
    %v172 = vand.u32 %v171, 4294901760
    %173 = vmatmul.mubr.f32.gmra.mrb[0].mxu0 %v172
    %v174 = vpop.f32.mrb[0].mxu0
    %v175 = vadd.f32 0.0, %v174
    %v176 = vpop.f32.mrb[0].mxu0
    %177 = vmatprep.mubr.f32.mxu0 0.0
    %v178 = vand.u32 %v87, 4294901760
    %v179 = vsub.f32 %v87, %v178
    %v180 = vand.u32 %v179, 4294901760
    %v181 = vsub.f32 %v179, %v180
    %v182 = vand.u32 %v181, 4294901760
    %183 = vmatmul.mubr.f32.gmra.mrb[0].mxu0 %v182
    %v184 = vpop.f32.mrb[0].mxu0
    %v185 = vadd.f32 0.0, %v184
    %v186 = vpop.f32.mrb[0].mxu0
    %187 = vmatprep.mubr.f32.mxu0 0.0
    %v188 = vand.u32 %v90, 4294901760
    %v189 = vsub.f32 %v90, %v188
    %v190 = vand.u32 %v189, 4294901760
    %v191 = vsub.f32 %v189, %v190
    %v192 = vand.u32 %v191, 4294901760
    %193 = vmatmul.mubr.f32.gmra.mrb[0].mxu0 %v192
    %v194 = vpop.f32.mrb[0].mxu0
    %v195 = vadd.f32 0.0, %v194
    %v196 = vpop.f32.mrb[0].mxu0
    %197 = vdwg.mxu0
    %198 = vmatprep.subr.mxu0 0.0
    %v199 = vand.u32 %v53, 4294901760
    %v200 = vsub.f32 %v53, %v199
    %v201 = vand.u32 %v200, 4294901760
    %v202 = vsub.f32 %v200, %v201
    %v203 = vand.u32 %v202, 4294901760
    %204 = vmatpush1.msra.mxu0 %v203
    %205 = vmatprep.subr.mxu0 0.0
    %206 = vmatpush1.msra.mxu0 0.0
    %207 = vmatprep.subr.mxu0 0.0
    %208 = vmatpush1.msra.mxu0 0.0
    %209 = vmatprep.subr.mxu0 0.0
    %210 = vmatpush1.msra.mxu0 0.0
    %211 = vmatprep.subr.mxu0 0.0
    %212 = vmatpush1.msra.mxu0 0.0
    %213 = vmatprep.subr.mxu0 0.0
    %214 = vmatpush1.msra.mxu0 0.0
    %215 = vmatprep.subr.mxu0 0.0
    %216 = vmatpush1.msra.mxu0 0.0
    %217 = vmatprep.subr.mxu0 0.0
    %218 = vmatpush1.msra.mxu0 0.0
    %219 = vmatprep.subr.mxu0 0.0
    %220 = vmatpush1.msra.mxu0 0.0
    %221 = vmatprep.subr.mxu0 0.0
    %222 = vmatpush1.msra.mxu0 0.0
    %223 = vmatprep.subr.mxu0 0.0
    %224 = vmatpush1.msra.mxu0 0.0
    %225 = vmatprep.subr.mxu0 0.0
    %226 = vmatpush1.msra.mxu0 0.0
    %227 = vmatprep.subr.mxu0 0.0
    %228 = vmatpush1.msra.mxu0 0.0
    %229 = vmatprep.subr.mxu0 0.0
    %230 = vmatpush1.msra.mxu0 0.0
    %231 = vmatprep.subr.mxu0 0.0
    %232 = vmatpush1.msra.mxu0 0.0
    %233 = vmatprep.subr.mxu0 0.0
    %234 = vmatpush1.msra.mxu0 0.0
    %235 = vmatprep.subr.mxu0 0.0
    %236 = vmatpush1.msra.mxu0 0.0
    %237 = vmatprep.subr.mxu0 0.0
    %238 = vmatpush1.msra.mxu0 0.0
    %239 = vmatprep.subr.mxu0 0.0
    %240 = vmatpush1.msra.mxu0 0.0
    %241 = vmatprep.subr.mxu0 0.0
    %242 = vmatpush1.msra.mxu0 0.0
    %243 = vmatprep.subr.mxu0 0.0
    %244 = vmatpush1.msra.mxu0 0.0
    %245 = vmatprep.subr.mxu0 0.0
    %246 = vmatpush1.msra.mxu0 0.0
    %247 = vmatprep.subr.mxu0 0.0
    %248 = vmatpush1.msra.mxu0 0.0
    %249 = vmatprep.subr.mxu0 0.0
    %250 = vmatpush1.msra.mxu0 0.0
    %251 = vmatprep.subr.mxu0 0.0
    %252 = vmatpush1.msra.mxu0 0.0
    %253 = vmatprep.subr.mxu0 0.0
    %254 = vmatpush1.msra.mxu0 0.0
    %255 = vmatprep.subr.mxu0 0.0
    %256 = vmatpush1.msra.mxu0 0.0
    %257 = vmatprep.subr.mxu0 0.0
    %258 = vmatpush1.msra.mxu0 0.0
    %259 = vmatprep.subr.mxu0 0.0
    %260 = vmatpush1.msra.mxu0 0.0
    %261 = vmatprep.subr.mxu0 0.0
    %262 = vmatpush1.msra.mxu0 0.0
    %263 = vmatprep.subr.mxu0 0.0
    %264 = vmatpush1.msra.mxu0 0.0
    %265 = vmatprep.subr.mxu0 0.0
    %266 = vmatpush1.msra.mxu0 0.0
    %267 = vmatprep.mubr.f32.mxu0 0.0
    %v268 = vand.u32 %v81, 4294901760
    %269 = vmatmul.mubr.f32.gmra.mrb[0].mxu0 %v268
    %v270 = vpop.f32.mrb[0].mxu0
    %v271 = vadd.f32 %v165, %v270
    %v272 = vpop.f32.mrb[0].mxu0
    %273 = vmatprep.mubr.f32.mxu0 0.0
    %v274 = vand.u32 %v84, 4294901760
    %275 = vmatmul.mubr.f32.gmra.mrb[0].mxu0 %v274
    %v276 = vpop.f32.mrb[0].mxu0
    %v277 = vadd.f32 %v175, %v276
    %v278 = vpop.f32.mrb[0].mxu0
    %279 = vmatprep.mubr.f32.mxu0 0.0
    %v280 = vand.u32 %v87, 4294901760
    %281 = vmatmul.mubr.f32.gmra.mrb[0].mxu0 %v280
    %v282 = vpop.f32.mrb[0].mxu0
    %v283 = vadd.f32 %v185, %v282
    %v284 = vpop.f32.mrb[0].mxu0
    %285 = vmatprep.mubr.f32.mxu0 0.0
    %v286 = vand.u32 %v90, 4294901760
    %287 = vmatmul.mubr.f32.gmra.mrb[0].mxu0 %v286
    %v288 = vpop.f32.mrb[0].mxu0
    %v289 = vadd.f32 %v195, %v288
    %v290 = vpop.f32.mrb[0].mxu0
    %291 = vdwg.mxu0
    %292 = vmatprep.subr.mxu0 0.0
    %v293 = vand.u32 %v53, 4294901760
    %v294 = vsub.f32 %v53, %v293
    %295 = vmatpush1.msra.mxu0 %v294
    %296 = vmatprep.subr.mxu0 0.0
    %297 = vmatpush1.msra.mxu0 0.0
    %298 = vmatprep.subr.mxu0 0.0
    %299 = vmatpush1.msra.mxu0 0.0
    %300 = vmatprep.subr.mxu0 0.0
    %301 = vmatpush1.msra.mxu0 0.0
    %302 = vmatprep.subr.mxu0 0.0
    %303 = vmatpush1.msra.mxu0 0.0
    %304 = vmatprep.subr.mxu0 0.0
    %305 = vmatpush1.msra.mxu0 0.0
    %306 = vmatprep.subr.mxu0 0.0
    %307 = vmatpush1.msra.mxu0 0.0
    %308 = vmatprep.subr.mxu0 0.0
    %309 = vmatpush1.msra.mxu0 0.0
    %310 = vmatprep.subr.mxu0 0.0
    %311 = vmatpush1.msra.mxu0 0.0
    %312 = vmatprep.subr.mxu0 0.0
    %313 = vmatpush1.msra.mxu0 0.0
    %314 = vmatprep.subr.mxu0 0.0
    %315 = vmatpush1.msra.mxu0 0.0
    %316 = vmatprep.subr.mxu0 0.0
    %317 = vmatpush1.msra.mxu0 0.0
    %318 = vmatprep.subr.mxu0 0.0
    %319 = vmatpush1.msra.mxu0 0.0
    %320 = vmatprep.subr.mxu0 0.0
    %321 = vmatpush1.msra.mxu0 0.0
    %322 = vmatprep.subr.mxu0 0.0
    %323 = vmatpush1.msra.mxu0 0.0
    %324 = vmatprep.subr.mxu0 0.0
    %325 = vmatpush1.msra.mxu0 0.0
    %326 = vmatprep.subr.mxu0 0.0
    %327 = vmatpush1.msra.mxu0 0.0
    %328 = vmatprep.subr.mxu0 0.0
    %329 = vmatpush1.msra.mxu0 0.0
    %330 = vmatprep.subr.mxu0 0.0
    %331 = vmatpush1.msra.mxu0 0.0
    %332 = vmatprep.subr.mxu0 0.0
    %333 = vmatpush1.msra.mxu0 0.0
    %334 = vmatprep.subr.mxu0 0.0
    %335 = vmatpush1.msra.mxu0 0.0
    %336 = vmatprep.subr.mxu0 0.0
    %337 = vmatpush1.msra.mxu0 0.0
    %338 = vmatprep.subr.mxu0 0.0
    %339 = vmatpush1.msra.mxu0 0.0
    %340 = vmatprep.subr.mxu0 0.0
    %341 = vmatpush1.msra.mxu0 0.0
    %342 = vmatprep.subr.mxu0 0.0
    %343 = vmatpush1.msra.mxu0 0.0
    %344 = vmatprep.subr.mxu0 0.0
    %345 = vmatpush1.msra.mxu0 0.0
    %346 = vmatprep.subr.mxu0 0.0
    %347 = vmatpush1.msra.mxu0 0.0
    %348 = vmatprep.subr.mxu0 0.0
    %349 = vmatpush1.msra.mxu0 0.0
    %350 = vmatprep.subr.mxu0 0.0
    %351 = vmatpush1.msra.mxu0 0.0
    %352 = vmatprep.subr.mxu0 0.0
    %353 = vmatpush1.msra.mxu0 0.0
    %354 = vmatprep.subr.mxu0 0.0
    %355 = vmatpush1.msra.mxu0 0.0
    %356 = vmatprep.subr.mxu0 0.0
    %357 = vmatpush1.msra.mxu0 0.0
    %358 = vmatprep.mubr.f32.mxu0 0.0
    %v359 = vand.u32 %v81, 4294901760
    %v360 = vsub.f32 %v81, %v359
    %361 = vmatmul.mubr.f32.gmra.mrb[0].mxu0 %v360
    %v362 = vpop.f32.mrb[0].mxu0
    %v363 = vadd.f32 %v271, %v362
    %v364 = vpop.f32.mrb[0].mxu0
    %365 = vmatprep.mubr.f32.mxu0 0.0
    %v366 = vand.u32 %v84, 4294901760
    %v367 = vsub.f32 %v84, %v366
    %368 = vmatmul.mubr.f32.gmra.mrb[0].mxu0 %v367
    %v369 = vpop.f32.mrb[0].mxu0
    %v370 = vadd.f32 %v277, %v369
    %v371 = vpop.f32.mrb[0].mxu0
    %372 = vmatprep.mubr.f32.mxu0 0.0
    %v373 = vand.u32 %v87, 4294901760
    %v374 = vsub.f32 %v87, %v373
    %375 = vmatmul.mubr.f32.gmra.mrb[0].mxu0 %v374
    %v376 = vpop.f32.mrb[0].mxu0
    %v377 = vadd.f32 %v283, %v376
    %v378 = vpop.f32.mrb[0].mxu0
    %379 = vmatprep.mubr.f32.mxu0 0.0
    %v380 = vand.u32 %v90, 4294901760
    %v381 = vsub.f32 %v90, %v380
    %382 = vmatmul.mubr.f32.gmra.mrb[0].mxu0 %v381
    %v383 = vpop.f32.mrb[0].mxu0
    %v384 = vadd.f32 %v289, %v383
    %v385 = vpop.f32.mrb[0].mxu0
    %386 = vdwg.mxu0
    %387 = vmatprep.subr.mxu0 0.0
    %v388 = vand.u32 %v53, 4294901760
    %389 = vmatpush1.msra.mxu0 %v388
    %390 = vmatprep.subr.mxu0 0.0
    %391 = vmatpush1.msra.mxu0 0.0
    %392 = vmatprep.subr.mxu0 0.0
    %393 = vmatpush1.msra.mxu0 0.0
    %394 = vmatprep.subr.mxu0 0.0
    %395 = vmatpush1.msra.mxu0 0.0
    %396 = vmatprep.subr.mxu0 0.0
    %397 = vmatpush1.msra.mxu0 0.0
    %398 = vmatprep.subr.mxu0 0.0
    %399 = vmatpush1.msra.mxu0 0.0
    %400 = vmatprep.subr.mxu0 0.0
    %401 = vmatpush1.msra.mxu0 0.0
    %402 = vmatprep.subr.mxu0 0.0
    %403 = vmatpush1.msra.mxu0 0.0
    %404 = vmatprep.subr.mxu0 0.0
    %405 = vmatpush1.msra.mxu0 0.0
    %406 = vmatprep.subr.mxu0 0.0
    %407 = vmatpush1.msra.mxu0 0.0
    %408 = vmatprep.subr.mxu0 0.0
    %409 = vmatpush1.msra.mxu0 0.0
    %410 = vmatprep.subr.mxu0 0.0
    %411 = vmatpush1.msra.mxu0 0.0
    %412 = vmatprep.subr.mxu0 0.0
    %413 = vmatpush1.msra.mxu0 0.0
    %414 = vmatprep.subr.mxu0 0.0
    %415 = vmatpush1.msra.mxu0 0.0
    %416 = vmatprep.subr.mxu0 0.0
    %417 = vmatpush1.msra.mxu0 0.0
    %418 = vmatprep.subr.mxu0 0.0
    %419 = vmatpush1.msra.mxu0 0.0
    %420 = vmatprep.subr.mxu0 0.0
    %421 = vmatpush1.msra.mxu0 0.0
    %422 = vmatprep.subr.mxu0 0.0
    %423 = vmatpush1.msra.mxu0 0.0
    %424 = vmatprep.subr.mxu0 0.0
    %425 = vmatpush1.msra.mxu0 0.0
    %426 = vmatprep.subr.mxu0 0.0
    %427 = vmatpush1.msra.mxu0 0.0
    %428 = vmatprep.subr.mxu0 0.0
    %429 = vmatpush1.msra.mxu0 0.0
    %430 = vmatprep.subr.mxu0 0.0
    %431 = vmatpush1.msra.mxu0 0.0
    %432 = vmatprep.subr.mxu0 0.0
    %433 = vmatpush1.msra.mxu0 0.0
    %434 = vmatprep.subr.mxu0 0.0
    %435 = vmatpush1.msra.mxu0 0.0
    %436 = vmatprep.subr.mxu0 0.0
    %437 = vmatpush1.msra.mxu0 0.0
    %438 = vmatprep.subr.mxu0 0.0
    %439 = vmatpush1.msra.mxu0 0.0
    %440 = vmatprep.subr.mxu0 0.0
    %441 = vmatpush1.msra.mxu0 0.0
    %442 = vmatprep.subr.mxu0 0.0
    %443 = vmatpush1.msra.mxu0 0.0
    %444 = vmatprep.subr.mxu0 0.0
    %445 = vmatpush1.msra.mxu0 0.0
    %446 = vmatprep.subr.mxu0 0.0
    %447 = vmatpush1.msra.mxu0 0.0
    %448 = vmatprep.subr.mxu0 0.0
    %449 = vmatpush1.msra.mxu0 0.0
    %450 = vmatprep.subr.mxu0 0.0
    %451 = vmatpush1.msra.mxu0 0.0
    %452 = vmatprep.mubr.f32.mxu0 0.0
    %v453 = vand.u32 %v81, 4294901760
    %v454 = vsub.f32 %v81, %v453
    %v455 = vand.u32 %v454, 4294901760
    %456 = vmatmul.mubr.f32.gmra.mrb[0].mxu0 %v455
    %v457 = vpop.f32.mrb[0].mxu0
    %v458 = vadd.f32 %v363, %v457
    %v459 = vpop.f32.mrb[0].mxu0
    %460 = vmatprep.mubr.f32.mxu0 0.0
    %v461 = vand.u32 %v84, 4294901760
    %v462 = vsub.f32 %v84, %v461
    %v463 = vand.u32 %v462, 4294901760
    %464 = vmatmul.mubr.f32.gmra.mrb[0].mxu0 %v463
    %v465 = vpop.f32.mrb[0].mxu0
    %v466 = vadd.f32 %v370, %v465
    %v467 = vpop.f32.mrb[0].mxu0
    %468 = vmatprep.mubr.f32.mxu0 0.0
    %v469 = vand.u32 %v87, 4294901760
    %v470 = vsub.f32 %v87, %v469
    %v471 = vand.u32 %v470, 4294901760
    %472 = vmatmul.mubr.f32.gmra.mrb[0].mxu0 %v471
    %v473 = vpop.f32.mrb[0].mxu0
    %v474 = vadd.f32 %v377, %v473
    %v475 = vpop.f32.mrb[0].mxu0
    %476 = vmatprep.mubr.f32.mxu0 0.0
    %v477 = vand.u32 %v90, 4294901760
    %v478 = vsub.f32 %v90, %v477
    %v479 = vand.u32 %v478, 4294901760
    %480 = vmatmul.mubr.f32.gmra.mrb[0].mxu0 %v479
    %v481 = vpop.f32.mrb[0].mxu0
    %v482 = vadd.f32 %v384, %v481
    %v483 = vpop.f32.mrb[0].mxu0
    %484 = vdwg.mxu0
    %485 = vmatprep.subr.mxu0 0.0
    %v486 = vand.u32 %v53, 4294901760
    %v487 = vsub.f32 %v53, %v486
    %v488 = vand.u32 %v487, 4294901760
    %489 = vmatpush1.msra.mxu0 %v488
    %490 = vmatprep.subr.mxu0 0.0
    %491 = vmatpush1.msra.mxu0 0.0
    %492 = vmatprep.subr.mxu0 0.0
    %493 = vmatpush1.msra.mxu0 0.0
    %494 = vmatprep.subr.mxu0 0.0
    %495 = vmatpush1.msra.mxu0 0.0
    %496 = vmatprep.subr.mxu0 0.0
    %497 = vmatpush1.msra.mxu0 0.0
    %498 = vmatprep.subr.mxu0 0.0
    %499 = vmatpush1.msra.mxu0 0.0
    %500 = vmatprep.subr.mxu0 0.0
    %501 = vmatpush1.msra.mxu0 0.0
    %502 = vmatprep.subr.mxu0 0.0
    %503 = vmatpush1.msra.mxu0 0.0
    %504 = vmatprep.subr.mxu0 0.0
    %505 = vmatpush1.msra.mxu0 0.0
    %506 = vmatprep.subr.mxu0 0.0
    %507 = vmatpush1.msra.mxu0 0.0
    %508 = vmatprep.subr.mxu0 0.0
    %509 = vmatpush1.msra.mxu0 0.0
    %510 = vmatprep.subr.mxu0 0.0
    %511 = vmatpush1.msra.mxu0 0.0
    %512 = vmatprep.subr.mxu0 0.0
    %513 = vmatpush1.msra.mxu0 0.0
    %514 = vmatprep.subr.mxu0 0.0
    %515 = vmatpush1.msra.mxu0 0.0
    %516 = vmatprep.subr.mxu0 0.0
    %517 = vmatpush1.msra.mxu0 0.0
    %518 = vmatprep.subr.mxu0 0.0
    %519 = vmatpush1.msra.mxu0 0.0
    %520 = vmatprep.subr.mxu0 0.0
    %521 = vmatpush1.msra.mxu0 0.0
    %522 = vmatprep.subr.mxu0 0.0
    %523 = vmatpush1.msra.mxu0 0.0
    %524 = vmatprep.subr.mxu0 0.0
    %525 = vmatpush1.msra.mxu0 0.0
    %526 = vmatprep.subr.mxu0 0.0
    %527 = vmatpush1.msra.mxu0 0.0
    %528 = vmatprep.subr.mxu0 0.0
    %529 = vmatpush1.msra.mxu0 0.0
    %530 = vmatprep.subr.mxu0 0.0
    %531 = vmatpush1.msra.mxu0 0.0
    %532 = vmatprep.subr.mxu0 0.0
    %533 = vmatpush1.msra.mxu0 0.0
    %534 = vmatprep.subr.mxu0 0.0
    %535 = vmatpush1.msra.mxu0 0.0
    %536 = vmatprep.subr.mxu0 0.0
    %537 = vmatpush1.msra.mxu0 0.0
    %538 = vmatprep.subr.mxu0 0.0
    %539 = vmatpush1.msra.mxu0 0.0
    %540 = vmatprep.subr.mxu0 0.0
    %541 = vmatpush1.msra.mxu0 0.0
    %542 = vmatprep.subr.mxu0 0.0
    %543 = vmatpush1.msra.mxu0 0.0
    %544 = vmatprep.subr.mxu0 0.0
    %545 = vmatpush1.msra.mxu0 0.0
    %546 = vmatprep.subr.mxu0 0.0
    %547 = vmatpush1.msra.mxu0 0.0
    %548 = vmatprep.subr.mxu0 0.0
    %549 = vmatpush1.msra.mxu0 0.0
    %550 = vmatprep.subr.mxu0 0.0
    %551 = vmatpush1.msra.mxu0 0.0
    %552 = vmatprep.mubr.f32.mxu0 0.0
    %v553 = vand.u32 %v81, 4294901760
    %554 = vmatmul.mubr.f32.gmra.mrb[0].mxu0 %v553
    %v555 = vpop.f32.mrb[0].mxu0
    %v556 = vadd.f32 %v458, %v555
    %v557 = vpop.f32.mrb[0].mxu0
    %558 = vmatprep.mubr.f32.mxu0 0.0
    %v559 = vand.u32 %v84, 4294901760
    %560 = vmatmul.mubr.f32.gmra.mrb[0].mxu0 %v559
    %v561 = vpop.f32.mrb[0].mxu0
    %v562 = vadd.f32 %v466, %v561
    %v563 = vpop.f32.mrb[0].mxu0
    %564 = vmatprep.mubr.f32.mxu0 0.0
    %v565 = vand.u32 %v87, 4294901760
    %566 = vmatmul.mubr.f32.gmra.mrb[0].mxu0 %v565
    %v567 = vpop.f32.mrb[0].mxu0
    %v568 = vadd.f32 %v474, %v567
    %v569 = vpop.f32.mrb[0].mxu0
    %570 = vmatprep.mubr.f32.mxu0 0.0
    %v571 = vand.u32 %v90, 4294901760
    %572 = vmatmul.mubr.f32.gmra.mrb[0].mxu0 %v571
    %v573 = vpop.f32.mrb[0].mxu0
    %v574 = vadd.f32 %v482, %v573
    %v575 = vpop.f32.mrb[0].mxu0
    %576 = vdwg.mxu0
    %577 = vmatprep.subr.mxu0 0.0
    %v578 = vand.u32 %v53, 4294901760
    %579 = vmatpush1.msra.mxu0 %v578
    %580 = vmatprep.subr.mxu0 0.0
    %581 = vmatpush1.msra.mxu0 0.0
    %582 = vmatprep.subr.mxu0 0.0
    %583 = vmatpush1.msra.mxu0 0.0
    %584 = vmatprep.subr.mxu0 0.0
    %585 = vmatpush1.msra.mxu0 0.0
    %586 = vmatprep.subr.mxu0 0.0
    %587 = vmatpush1.msra.mxu0 0.0
    %588 = vmatprep.subr.mxu0 0.0
    %589 = vmatpush1.msra.mxu0 0.0
    %590 = vmatprep.subr.mxu0 0.0
    %591 = vmatpush1.msra.mxu0 0.0
    %592 = vmatprep.subr.mxu0 0.0
    %593 = vmatpush1.msra.mxu0 0.0
    %594 = vmatprep.subr.mxu0 0.0
    %595 = vmatpush1.msra.mxu0 0.0
    %596 = vmatprep.subr.mxu0 0.0
    %597 = vmatpush1.msra.mxu0 0.0
    %598 = vmatprep.subr.mxu0 0.0
    %599 = vmatpush1.msra.mxu0 0.0
    %600 = vmatprep.subr.mxu0 0.0
    %601 = vmatpush1.msra.mxu0 0.0
    %602 = vmatprep.subr.mxu0 0.0
    %603 = vmatpush1.msra.mxu0 0.0
    %604 = vmatprep.subr.mxu0 0.0
    %605 = vmatpush1.msra.mxu0 0.0
    %606 = vmatprep.subr.mxu0 0.0
    %607 = vmatpush1.msra.mxu0 0.0
    %608 = vmatprep.subr.mxu0 0.0
    %609 = vmatpush1.msra.mxu0 0.0
    %610 = vmatprep.subr.mxu0 0.0
    %611 = vmatpush1.msra.mxu0 0.0
    %612 = vmatprep.subr.mxu0 0.0
    %613 = vmatpush1.msra.mxu0 0.0
    %614 = vmatprep.subr.mxu0 0.0
    %615 = vmatpush1.msra.mxu0 0.0
    %616 = vmatprep.subr.mxu0 0.0
    %617 = vmatpush1.msra.mxu0 0.0
    %618 = vmatprep.subr.mxu0 0.0
    %619 = vmatpush1.msra.mxu0 0.0
    %620 = vmatprep.subr.mxu0 0.0
    %621 = vmatpush1.msra.mxu0 0.0
    %622 = vmatprep.subr.mxu0 0.0
    %623 = vmatpush1.msra.mxu0 0.0
    %624 = vmatprep.subr.mxu0 0.0
    %625 = vmatpush1.msra.mxu0 0.0
    %626 = vmatprep.subr.mxu0 0.0
    %627 = vmatpush1.msra.mxu0 0.0
    %628 = vmatprep.subr.mxu0 0.0
    %629 = vmatpush1.msra.mxu0 0.0
    %630 = vmatprep.subr.mxu0 0.0
    %631 = vmatpush1.msra.mxu0 0.0
    %632 = vmatprep.subr.mxu0 0.0
    %633 = vmatpush1.msra.mxu0 0.0
    %634 = vmatprep.subr.mxu0 0.0
    %635 = vmatpush1.msra.mxu0 0.0
    %636 = vmatprep.subr.mxu0 0.0
    %637 = vmatpush1.msra.mxu0 0.0
    %638 = vmatprep.subr.mxu0 0.0
    %639 = vmatpush1.msra.mxu0 0.0
    %640 = vmatprep.subr.mxu0 0.0
    %641 = vmatpush1.msra.mxu0 0.0
    %642 = vmatprep.mubr.f32.mxu0 0.0
    %v643 = vand.u32 %v81, 4294901760
    %644 = vmatmul.mubr.f32.gmra.mrb[0].mxu0 %v643
    %v645 = vpop.f32.mrb[0].mxu0
    %v646 = vadd.f32 %v556, %v645
    %v647 = vpop.f32.mrb[0].mxu0
    %648 = vmatprep.mubr.f32.mxu0 0.0
    %v649 = vand.u32 %v84, 4294901760
    %650 = vmatmul.mubr.f32.gmra.mrb[0].mxu0 %v649
    %v651 = vpop.f32.mrb[0].mxu0
    %v652 = vadd.f32 %v562, %v651
    %v653 = vpop.f32.mrb[0].mxu0
    %654 = vmatprep.mubr.f32.mxu0 0.0
    %v655 = vand.u32 %v87, 4294901760
    %656 = vmatmul.mubr.f32.gmra.mrb[0].mxu0 %v655
    %v657 = vpop.f32.mrb[0].mxu0
    %v658 = vadd.f32 %v568, %v657
    %v659 = vpop.f32.mrb[0].mxu0
    %660 = vmatprep.mubr.f32.mxu0 0.0
    %v661 = vand.u32 %v90, 4294901760
    %662 = vmatmul.mubr.f32.gmra.mrb[0].mxu0 %v661
    %v663 = vpop.f32.mrb[0].mxu0
    %v664 = vadd.f32 %v574, %v663
    %v665 = vpop.f32.mrb[0].mxu0
    %666 = vdwg.mxu0
    %v667 = vadd.f32 %v75, %v646
    %v668 = vadd.f32 %v76, %v652
    %v669 = vadd.f32 %v77, %v658
    %v670 = vadd.f32 %v78, %v664
    %vm671 = vcmask 261120
    %672 = vst.msk [vmem:[#allocation2] sm:$0xff] %vm671, %v667
    %673 = vst.msk [vmem:[#allocation2 + $0x8] sm:$0xff] %vm671, %v668
    %674 = vst.msk [vmem:[#allocation2 + $0x10] sm:$0xff] %vm671, %v669
    %675 = vst.msk [vmem:[#allocation2 + $0x18] sm:$0xff] %vm671, %v670
    // Predicated region
    $region18: #{tpu_custom_call.1} parent=1 // pred_check
      %p676 = pneg %p42
    $region19: #{tpu_custom_call.1} parent=1 // pred_check_branch
      %678 = sbr.rel (%p676) target = $region21
    $region20: #{tpu_custom_call.1} parent=1 // pred_region
      %v679 = vlaneseq
      %v680 = vand.u32 %v679, 127
      %vm681 = vcmp.eq.s32.totalorder %v55, %v680
      %vm682 = vcmp.eq.s32.totalorder %v56, %v680
      %vm683 = vcmp.eq.s32.totalorder %v57, %v680
      %vm684 = vcmp.eq.s32.totalorder %v58, %v680
      %v685 = vld [vmem:[#allocation2] sm:$0xff]
      %v686 = vld [vmem:[#allocation2 + $0x8] sm:$0xff]
      %v687 = vld [vmem:[#allocation2 + $0x10] sm:$0xff]
      %v688 = vld [vmem:[#allocation2 + $0x18] sm:$0xff]
      %v689 = vsel %vm681, %v685, 0.0
      %v690 = vsel %vm682, %v686, 0.0
      %v691 = vsel %vm683, %v687, 0.0
      %v692 = vsel %vm684, %v688, 0.0
      %v693 = vsel %vm671, %v689, 0.0
      %v694 = vsel %vm671, %v690, 0.0
      %v695 = vadd.f32 %v693, %v694
      %v696 = vsel %vm671, %v691, 0.0
      %v697 = vadd.f32 %v695, %v696
      %v698 = vsel %vm671, %v692, 0.0
      %v699 = vadd.f32 %v697, %v698
      %700 = vadd.xlane.f32.xlu0 %v699
      %v701 = vpop.xlane.xlu0 %700
      %v702 = vrot.slane %v701, 4
      %v703 = vadd.f32 %v701, %v702
      %v704 = vrot.slane %v703, 2
      %v705 = vadd.f32 %v703, %v704
      %v706 = vrot.slane %v705, 1
      %v707 = vadd.f32 %v705, %v706
      %s708 = vtos %v707
      %v709 = vstv %s708
      %v710 = vadd.f32 %v709, 0.0
      %vm711 = vcmask 0
      %712 = vst.msk [vmem:[#allocation6] sm:$0x1] %vm711, %v710
    $region21: #{tpu_custom_call.1} parent=1 // pred_fallthru
      _
    // Predicated region
    $region22: #{tpu_custom_call.1} parent=1 // pred_check
      _
    $region23: #{tpu_custom_call.1} parent=1 // pred_check_branch
      %714 = sbr.rel (0) target = $region25
    $region24: #{tpu_custom_call.1} parent=1 // pred_region
      %s716 = ssub.s32 16, 16
      %717 = vsyncadd [#allocation5], %s716
      %s719 = sshll.u32 [#allocation6], 4
      %s720 = int_to_ptr.vmem [resolvable:$true] %s719
      %722 = dma.vmem_to_hbm [thread:$0]  %s720, 16, %s2, [#allocation5]
    $region25: #{tpu_custom_call.1} parent=1 // pred_fallthru
      _
    // Predicated region
    $region26: #{tpu_custom_call.1} parent=1 // pred_check
      _
    $region27: #{tpu_custom_call.1} parent=1 // pred_check_branch
      %724 = sbr.rel (0) target = $region29
    $region28: #{tpu_custom_call.1} parent=1 // pred_region
      %725 = dma.done [#allocation5], 16
    $region29: #{tpu_custom_call.1} parent=1 // pred_fallthru
      _
    %726 = vsyncpa [#allocation4], 1
    %727 = vsyncpa [#allocation5], 1

</llo_original>
